<compile_context>
chip_gen: v6e
topology: v6e:2x2x1
jax: 0.10.0
libtpu: 0.0.40
codegen_flags: <defaults>
</compile_context>

<pallas_src>
import functools

import jax
import jax.numpy as jnp
from jax.experimental import pallas as pl
from jax.experimental.pallas import tpu as pltpu

_LANE = 128
_SUB = 16          # sublane multiple that is safe for both f32 and bf16 blocks
_BN_EPS = 1e-5


def _round_up(n, m):
    return ((n + m - 1) // m) * m


def _pad2(a, rows, cols):
    return jnp.pad(a, ((0, rows - a.shape[0]), (0, cols - a.shape[1])))


def _pad1(a, n):
    return jnp.pad(a, (0, n - a.shape[0]))


def _mlp_kernel(x_ref, w0_ref, ws_ref, bs_ref, out_ref):
    """Fused 5-layer MLP on one (tb, input_size) batch tile.

    x arrives in its HBM dtype (f32) and is cast to bf16 just before the first
    MXU matmul.  All accumulation, bias, BN affine and ReLU run in f32.
    bs_ref rows: 0..4 = biases of the 5 linears (row 0 already includes the BN
    shift), row 5 = BN scale.  Dropout is identity (eval mode).  All feature
    widths are padded to 128 lanes so every store is lane-dense.
    """
    cdt = w0_ref.dtype                      # bf16 MXU compute dtype
    scale = bs_ref[5:6, :]                  # (1, H) f32 BatchNorm scale

    # input_layer + BatchNorm (f32 affine) + relu
    h = jnp.dot(x_ref[...].astype(cdt), w0_ref[...],
                preferred_element_type=jnp.float32)
    h = jnp.maximum(h * scale + bs_ref[0:1, :], 0.0)

    # layer1..layer3 + relu (dropout == identity in eval mode)
    for i in range(3):
        h = jnp.dot(h.astype(cdt), ws_ref[i],
                    preferred_element_type=jnp.float32)
        h = jnp.maximum(h + bs_ref[i + 1:i + 2, :], 0.0)

    # output_layer (no activation); lane-dense bf16 store
    out = jnp.dot(h.astype(cdt), ws_ref[3],
                  preferred_element_type=jnp.float32)
    out_ref[...] = (out + bs_ref[4:5, :]).astype(out_ref.dtype)


@functools.partial(
    jax.jit, static_argnames=("input_size", "output_size", "hidden", "block_batch"))
def sparse_layered_nn_forward(x, params, *, input_size, output_size,
                              hidden=128, block_batch=2048):
    """Flatten NCHW, stack/pad the (tiny, resident) weights, and launch a
    batch-tiled fused Pallas kernel.  x itself is never copied in the wrapper."""
    x2d = x.reshape(-1, input_size)          # x.view(-1, input_size); no dtype pass
    batch = x2d.shape[0]
    hdim = _round_up(hidden, _LANE)          # padded lane width of every layer

    # Eval-mode BatchNorm1d as a per-feature f32 affine applied after layer 0.
    bn_scale = params["bn_gamma"] / jnp.sqrt(params["bn_var"] + _BN_EPS)
    bn_shift = params["bn_beta"] - params["bn_mean"] * bn_scale
    b0 = params["b0"] * bn_scale + bn_shift

    # Resident parameter blocks: one bf16 first-layer weight, one stacked
    # (4,H,H) bf16 weight array, one (6,H) f32 bias/scale array.
    w0 = _pad2(params["w0"], input_size, hdim).astype(jnp.bfloat16)
    ws = jnp.stack([_pad2(params[f"w{i}"], hdim, hdim)
                    for i in (1, 2, 3, 4)]).astype(jnp.bfloat16)
    bs = jnp.stack([_pad1(b0, hdim)]
                   + [_pad1(params[f"b{i}"], hdim) for i in (1, 2, 3, 4)]
                   + [_pad1(bn_scale, hdim)]).astype(jnp.float32)

    # Batch tile: >=2 grid steps when possible (v7x megacore sharding), ragged
    # last tile handled by Pallas masking (no pad/copy of x).  Cap tb so the
    # double-buffered x/out tiles + resident weights fit comfortably in VMEM.
    bb = max(_SUB, _round_up(block_batch, _SUB))
    n_steps = max(2, pl.cdiv(batch, bb))
    tb = _round_up(pl.cdiv(batch, n_steps), _SUB)

    x_item = x2d.dtype.itemsize
    weight_bytes = 2 * (w0.size * 2 + ws.size * 2 + bs.size * 4)
    row_bytes = 2 * (input_size * x_item + hdim * 2)   # double-buffered in+out
    budget = 40 * 1024 * 1024
    tb_cap = max(_SUB, ((budget - weight_bytes) // row_bytes) // _SUB * _SUB)
    tb = max(_SUB, min(tb, tb_cap, bb))

    grid = (pl.cdiv(batch, tb),)
    vmem_need = weight_bytes + tb * row_bytes + (2 << 20)
    vmem_limit = int(min(64 * 1024 * 1024, max(32 * 1024 * 1024, vmem_need)))

    dims = [input_size, hidden, hidden // 2, hidden // 4, hidden // 8, output_size]
    flops = 2 * batch * sum(dims[i] * dims[i + 1] for i in range(5))
    bytes_accessed = (batch * input_size * x_item
                      + w0.size * 2 + ws.size * 2 + bs.size * 4
                      + batch * hdim * 2)

    out = pl.pallas_call(
        _mlp_kernel,
        out_shape=jax.ShapeDtypeStruct((batch, hdim), jnp.bfloat16),
        grid=grid,
        in_specs=[
            pl.BlockSpec((tb, input_size), lambda i: (i, 0)),       # x tile
            pl.BlockSpec((input_size, hdim), lambda i: (0, 0)),     # w0 (resident)
            pl.BlockSpec((4, hdim, hdim), lambda i: (0, 0, 0)),     # w1..w4
            pl.BlockSpec((6, hdim), lambda i: (0, 0)),              # biases + BN scale
        ],
        out_specs=pl.BlockSpec((tb, hdim), lambda i: (i, 0)),
        compiler_params=pltpu.CompilerParams(
            dimension_semantics=("parallel",),
            vmem_limit_bytes=vmem_limit),
        cost_estimate=pl.CostEstimate(
            flops=flops, transcendentals=0, bytes_accessed=bytes_accessed),
    )(x2d, w0, ws, bs)

    # Slice only the real logit lanes (batch dim is exact) and cast to f32;
    # XLA fuses this into a single small pass over the bf16 output.
    return out[:, :output_size].astype(jnp.float32)


def init_params(key, input_size, output_size, hidden=128):
    """Deterministic synthetic parameters matching the module's shapes.
    Weights are stored transposed vs torch ((in, out)) so kernel does x @ W."""
    dims = [
        (input_size, hidden),            # input_layer
        (hidden, hidden // 2),           # layer1
        (hidden // 2, hidden // 4),      # layer2
        (hidden // 4, hidden // 8),      # layer3
        (hidden // 8, output_size),      # output_layer
    ]
    params = {}
    keys = jax.random.split(key, 2 * len(dims) + 4)
    for i, (fan_in, fan_out) in enumerate(dims):
        bound = 1.0 / jnp.sqrt(fan_in)
        params[f"w{i}"] = jax.random.uniform(
            keys[2 * i], (fan_in, fan_out), jnp.float32, -bound, bound)
        params[f"b{i}"] = jax.random.uniform(
            keys[2 * i + 1], (fan_out,), jnp.float32, -bound, bound)
    # BatchNorm1d(hidden) eval-mode parameters / running stats.
    params["bn_gamma"] = 1.0 + 0.1 * jax.random.normal(keys[-4], (hidden,), jnp.float32)
    params["bn_beta"] = 0.1 * jax.random.normal(keys[-3], (hidden,), jnp.float32)
    params["bn_mean"] = 0.1 * jax.random.normal(keys[-2], (hidden,), jnp.float32)
    params["bn_var"] = jnp.abs(
        1.0 + 0.1 * jax.random.normal(keys[-1], (hidden,), jnp.float32))
    return params


def reference_forward(x, params, input_size):
    """Pure-JAX reference with identical eval-mode semantics and the same
    mixed precision as the kernel (bf16 matmul inputs, f32 accumulate/affine,
    bf16 logit store)."""
    bn_scale = params["bn_gamma"] / jnp.sqrt(params["bn_var"] + _BN_EPS)
    bn_shift = params["bn_beta"] - params["bn_mean"] * bn_scale
    b0 = params["b0"] * bn_scale + bn_shift

    h = x.reshape(-1, input_size)
    h = jnp.dot(h.astype(jnp.bfloat16), params["w0"].astype(jnp.bfloat16),
                preferred_element_type=jnp.float32)
    h = jnp.maximum(h * bn_scale + b0, 0.0)
    for i in (1, 2, 3):
        h = jnp.dot(h.astype(jnp.bfloat16), params[f"w{i}"].astype(jnp.bfloat16),
                    preferred_element_type=jnp.float32)
        h = jnp.maximum(h + params[f"b{i}"], 0.0)
    out = jnp.dot(h.astype(jnp.bfloat16), params["w4"].astype(jnp.bfloat16),
                  preferred_element_type=jnp.float32) + params["b4"]
    # Kernel stores logits as bf16; mirror that rounding for a tight comparison.
    return out.astype(jnp.bfloat16).astype(jnp.float32)


if __name__ == "__main__":
    key = jax.random.PRNGKey(0)
    k_x, k_p = jax.random.split(key)

    # Small NCHW input: batch=2, C=4, H=W=16  ->  input_size = 1024.
    batch, C, H, W = 2, 4, 16, 16
    input_size = C * H * W
    hidden = 128
    output_size = 10

    x = jax.random.normal(k_x, (batch, C, H, W), jnp.float32)
    params = init_params(k_p, input_size, output_size, hidden)

    out = sparse_layered_nn_forward(
        x, params, input_size=input_size, output_size=output_size, hidden=hidden)
    out = jax.block_until_ready(out)

    ref = reference_forward(x, params, input_size)
    assert out.shape == (batch, output_size), out.shape
    max_err = float(jnp.max(jnp.abs(out - ref)))
    assert jnp.allclose(out, ref, atol=2e-2, rtol=2e-2), max_err

    print("KERNEL_OK")
</pallas_src>

<mosaic_0001>
module attributes {stable_mosaic.version = 11 : i64} {
  func.func @_mlp_kernel(%arg0: i32, %arg1: memref<16x1024xf32, #tpu.memory_space<vmem>>, %arg2: memref<1024x128xbf16, #tpu.memory_space<vmem>>, %arg3: memref<4x128x128xbf16, #tpu.memory_space<vmem>>, %arg4: memref<6x128xf32, #tpu.memory_space<vmem>>, %arg5: memref<16x128xbf16, #tpu.memory_space<vmem>>) attributes {dimension_semantics = [#tpu.dimension_semantics<parallel>], iteration_bounds = array<i64: 1>, scalar_prefetch = 0 : i64, scratch_operands = 0 : i64, tpu.core_type = #tpu.core_type<tc>, window_params = [{transform_indices = @transform_0, window_bounds = array<i64: 16, 1024>}, {pipeline_mode = #tpu.pipeline_mode<synchronous>, transform_indices = @transform_1, window_bounds = array<i64: 1024, 128>}, {pipeline_mode = #tpu.pipeline_mode<synchronous>, transform_indices = @transform_2, window_bounds = array<i64: 4, 128, 128>}, {pipeline_mode = #tpu.pipeline_mode<synchronous>, transform_indices = @transform_3, window_bounds = array<i64: 6, 128>}, {transform_indices = @transform_4, window_bounds = array<i64: 16, 128>}]} {
    %c5 = arith.constant 5 : index
    %c0 = arith.constant 0 : index
    %0 = vector.load %arg4[%c5, %c0] : memref<6x128xf32, #tpu.memory_space<vmem>>, vector<1x128xf32>
    %c0_0 = arith.constant 0 : index
    %c0_1 = arith.constant 0 : index
    %1 = vector.load %arg1[%c0_0, %c0_1] : memref<16x1024xf32, #tpu.memory_space<vmem>>, vector<16x1024xf32>
    %2 = arith.truncf %1 : vector<16x1024xf32> to vector<16x1024xbf16>
    %c0_2 = arith.constant 0 : index
    %c0_3 = arith.constant 0 : index
    %3 = vector.load %arg2[%c0_2, %c0_3] : memref<1024x128xbf16, #tpu.memory_space<vmem>>, vector<1024x128xbf16>
    %cst = arith.constant dense<0.000000e+00> : vector<16x128xf32>
    %4 = tpu.matmul %2, %3, %cst {dimension_numbers = #tpu.dot_dimension_numbers<[1], [0], [0], [1], [0, 0, 1, 1], [], []>} : vector<16x1024xbf16>, vector<1024x128xbf16>, vector<16x128xf32> -> vector<16x128xf32>
    %5 = vector.broadcast %0 : vector<1x128xf32> to vector<16x128xf32>
    %6 = arith.mulf %4, %5 : vector<16x128xf32>
    %c0_4 = arith.constant 0 : index
    %c0_5 = arith.constant 0 : index
    %7 = vector.load %arg4[%c0_4, %c0_5] : memref<6x128xf32, #tpu.memory_space<vmem>>, vector<1x128xf32>
    %8 = vector.broadcast %7 : vector<1x128xf32> to vector<16x128xf32>
    %9 = arith.addf %6, %8 : vector<16x128xf32>
    %cst_6 = arith.constant 0.000000e+00 : f32
    %10 = vector.broadcast %cst_6 : f32 to vector<16x128xf32>
    %11 = arith.maximumf %9, %10 : vector<16x128xf32>
    %12 = arith.truncf %11 : vector<16x128xf32> to vector<16x128xbf16>
    %c0_7 = arith.constant 0 : index
    %c0_8 = arith.constant 0 : index
    %c0_9 = arith.constant 0 : index
    %13 = vector.load %arg3[%c0_7, %c0_8, %c0_9] : memref<4x128x128xbf16, #tpu.memory_space<vmem>>, vector<1x128x128xbf16>
    %14 = vector.shape_cast %13 : vector<1x128x128xbf16> to vector<128x128xbf16>
    %cst_10 = arith.constant dense<0.000000e+00> : vector<16x128xf32>
    %15 = tpu.matmul %12, %14, %cst_10 {dimension_numbers = #tpu.dot_dimension_numbers<[1], [0], [0], [1], [0, 0, 1, 1], [], []>} : vector<16x128xbf16>, vector<128x128xbf16>, vector<16x128xf32> -> vector<16x128xf32>
    %c1 = arith.constant 1 : index
    %c0_11 = arith.constant 0 : index
    %16 = vector.load %arg4[%c1, %c0_11] : memref<6x128xf32, #tpu.memory_space<vmem>>, vector<1x128xf32>
    %17 = vector.broadcast %16 : vector<1x128xf32> to vector<16x128xf32>
    %18 = arith.addf %15, %17 : vector<16x128xf32>
    %cst_12 = arith.constant 0.000000e+00 : f32
    %19 = vector.broadcast %cst_12 : f32 to vector<16x128xf32>
    %20 = arith.maximumf %18, %19 : vector<16x128xf32>
    %21 = arith.truncf %20 : vector<16x128xf32> to vector<16x128xbf16>
    %c1_13 = arith.constant 1 : index
    %c0_14 = arith.constant 0 : index
    %c0_15 = arith.constant 0 : index
    %22 = vector.load %arg3[%c1_13, %c0_14, %c0_15] : memref<4x128x128xbf16, #tpu.memory_space<vmem>>, vector<1x128x128xbf16>
    %23 = vector.shape_cast %22 : vector<1x128x128xbf16> to vector<128x128xbf16>
    %cst_16 = arith.constant dense<0.000000e+00> : vector<16x128xf32>
    %24 = tpu.matmul %21, %23, %cst_16 {dimension_numbers = #tpu.dot_dimension_numbers<[1], [0], [0], [1], [0, 0, 1, 1], [], []>} : vector<16x128xbf16>, vector<128x128xbf16>, vector<16x128xf32> -> vector<16x128xf32>
    %c2 = arith.constant 2 : index
    %c0_17 = arith.constant 0 : index
    %25 = vector.load %arg4[%c2, %c0_17] : memref<6x128xf32, #tpu.memory_space<vmem>>, vector<1x128xf32>
    %26 = vector.broadcast %25 : vector<1x128xf32> to vector<16x128xf32>
    %27 = arith.addf %24, %26 : vector<16x128xf32>
    %cst_18 = arith.constant 0.000000e+00 : f32
    %28 = vector.broadcast %cst_18 : f32 to vector<16x128xf32>
    %29 = arith.maximumf %27, %28 : vector<16x128xf32>
    %30 = arith.truncf %29 : vector<16x128xf32> to vector<16x128xbf16>
    %c2_19 = arith.constant 2 : index
    %c0_20 = arith.constant 0 : index
    %c0_21 = arith.constant 0 : index
    %31 = vector.load %arg3[%c2_19, %c0_20, %c0_21] : memref<4x128x128xbf16, #tpu.memory_space<vmem>>, vector<1x128x128xbf16>
    %32 = vector.shape_cast %31 : vector<1x128x128xbf16> to vector<128x128xbf16>
    %cst_22 = arith.constant dense<0.000000e+00> : vector<16x128xf32>
    %33 = tpu.matmul %30, %32, %cst_22 {dimension_numbers = #tpu.dot_dimension_numbers<[1], [0], [0], [1], [0, 0, 1, 1], [], []>} : vector<16x128xbf16>, vector<128x128xbf16>, vector<16x128xf32> -> vector<16x128xf32>
    %c3 = arith.constant 3 : index
    %c0_23 = arith.constant 0 : index
    %34 = vector.load %arg4[%c3, %c0_23] : memref<6x128xf32, #tpu.memory_space<vmem>>, vector<1x128xf32>
    %35 = vector.broadcast %34 : vector<1x128xf32> to vector<16x128xf32>
    %36 = arith.addf %33, %35 : vector<16x128xf32>
    %cst_24 = arith.constant 0.000000e+00 : f32
    %37 = vector.broadcast %cst_24 : f32 to vector<16x128xf32>
    %38 = arith.maximumf %36, %37 : vector<16x128xf32>
    %39 = arith.truncf %38 : vector<16x128xf32> to vector<16x128xbf16>
    %c3_25 = arith.constant 3 : index
    %c0_26 = arith.constant 0 : index
    %c0_27 = arith.constant 0 : index
    %40 = vector.load %arg3[%c3_25, %c0_26, %c0_27] : memref<4x128x128xbf16, #tpu.memory_space<vmem>>, vector<1x128x128xbf16>
    %41 = vector.shape_cast %40 : vector<1x128x128xbf16> to vector<128x128xbf16>
    %cst_28 = arith.constant dense<0.000000e+00> : vector<16x128xf32>
    %42 = tpu.matmul %39, %41, %cst_28 {dimension_numbers = #tpu.dot_dimension_numbers<[1], [0], [0], [1], [0, 0, 1, 1], [], []>} : vector<16x128xbf16>, vector<128x128xbf16>, vector<16x128xf32> -> vector<16x128xf32>
    %c4 = arith.constant 4 : index
    %c0_29 = arith.constant 0 : index
    %43 = vector.load %arg4[%c4, %c0_29] : memref<6x128xf32, #tpu.memory_space<vmem>>, vector<1x128xf32>
    %44 = vector.broadcast %43 : vector<1x128xf32> to vector<16x128xf32>
    %45 = arith.addf %42, %44 : vector<16x128xf32>
    %46 = arith.truncf %45 : vector<16x128xf32> to vector<16x128xbf16>
    %c0_30 = arith.constant 0 : index
    %c0_31 = arith.constant 0 : index
    %47 = vector.load %arg5[%c0_30, %c0_31] : memref<16x128xbf16, #tpu.memory_space<vmem>>, vector<16x128xbf16>
    tpu.vector_store %arg5[%c0_30, %c0_31], %46 {strides = array<i32>} : memref<16x128xbf16, #tpu.memory_space<vmem>>, vector<16x128xbf16>,
    return
  }
  func.func @transform_0(%arg0: i32) -> (i32, i32) {
    %c0_i32 = arith.constant 0 : i32
    %c0_i32_0 = arith.constant 0 : i32
    return %arg0, %c0_i32 : i32, i32
  }
  func.func @transform_1(%arg0: i32) -> (i32, i32) {
    %c0_i32 = arith.constant 0 : i32
    %c0_i32_0 = arith.constant 0 : i32
    %c0_i32_1 = arith.constant 0 : i32
    return %c0_i32, %c0_i32_0 : i32, i32
  }
  func.func @transform_2(%arg0: i32) -> (i32, i32, i32) {
    %c0_i32 = arith.constant 0 : i32
    %c0_i32_0 = arith.constant 0 : i32
    %c0_i32_1 = arith.constant 0 : i32
    %c0_i32_2 = arith.constant 0 : i32
    return %c0_i32, %c0_i32_0, %c0_i32_1 : i32, i32, i32
  }
  func.func @transform_3(%arg0: i32) -> (i32, i32) {
    %c0_i32 = arith.constant 0 : i32
    %c0_i32_0 = arith.constant 0 : i32
    %c0_i32_1 = arith.constant 0 : i32
    return %c0_i32, %c0_i32_0 : i32, i32
  }
  func.func @transform_4(%arg0: i32) -> (i32, i32) {
    %c0_i32 = arith.constant 0 : i32
    %c0_i32_0 = arith.constant 0 : i32
    return %arg0, %c0_i32 : i32, i32
  }
}

</mosaic_0001>

<llo_original>
// kernel: sparse_layered_nn_forward.1
$region0: #{sparse_layered_nn_forward.1}
  #allocation0 [shape = 'u32[]', space=smem, size = 0x4, offset = 0x4, fixed_abs, tag = 'smem constant byte address 0x4 - core index']
  #allocation1 [shape = 'u32[144,128]{1,0:T(1,128)}', space=vmem, size = 0x12000, scoped, tag = 'internal scratch']
  %s0 = inlined_call_operand.vmem [shape: f32[2,1024], index: 0, kind: input, shape index: {}]
  %s1 = inlined_call_operand.vmem [shape: bf16[1024,128], index: 1, kind: input, shape index: {}]
  %s2 = inlined_call_operand.vmem [shape: bf16[4,128,128], index: 2, kind: input, shape index: {}]
  %s3 = inlined_call_operand.vmem [shape: f32[6,128], index: 3, kind: input, shape index: {}]
  %s4 = inlined_call_operand.vmem [shape: bf16[2,128], index: 4, kind: output, shape index: {}]
  %s5 = sld [smem:[#allocation0]]
  $region56: #{sparse_layered_nn_forward.1} parent=0
    _
  %s7 = ssub.s32 1, %s5
  %s8 = scalar_select 0, %s7, %s5
  $region1: #{sparse_layered_nn_forward.1} parent=0
    #allocation2 [shape = 'u8[4096]{0}', space=vmem, size = 0x1000, scoped, tag = 'output window, operand 0, single buffered']
    // Predicated region
    $region2: #{sparse_layered_nn_forward.1} parent=1 // pred_check
      _
    $region3: #{sparse_layered_nn_forward.1} parent=1 // pred_check_branch
      %10 = sbr.rel (0) target = $region5
    $region4: #{sparse_layered_nn_forward.1} parent=1 // pred_region
      _
    $region5: #{sparse_layered_nn_forward.1} parent=1 // pred_fallthru
      _
    // Predicated region
    $region6: #{sparse_layered_nn_forward.1} parent=1 // pred_check
      _
    $region7: #{sparse_layered_nn_forward.1} parent=1 // pred_check_branch
      %12 = sbr.rel (0) target = $region9
    $region8: #{sparse_layered_nn_forward.1} parent=1 // pred_region
      _
    $region9: #{sparse_layered_nn_forward.1} parent=1 // pred_fallthru
      _
    // Predicated region
    $region10: #{sparse_layered_nn_forward.1} parent=1 // pred_check
      _
    $region11: #{sparse_layered_nn_forward.1} parent=1 // pred_check_branch
      %14 = sbr.rel (0) target = $region13
    $region12: #{sparse_layered_nn_forward.1} parent=1 // pred_region
      _
    $region13: #{sparse_layered_nn_forward.1} parent=1 // pred_fallthru
      _
    // Predicated region
    $region14: #{sparse_layered_nn_forward.1} parent=1 // pred_check
      _
    $region15: #{sparse_layered_nn_forward.1} parent=1 // pred_check_branch
      %16 = sbr.rel (0) target = $region17
    $region16: #{sparse_layered_nn_forward.1} parent=1 // pred_region
      _
    $region17: #{sparse_layered_nn_forward.1} parent=1 // pred_fallthru
      _
    %v18 = vld [vmem:[%s3 + $0x5] sm:$0x1]
    %v19 = vld [vmem:[%s0] sm:$0xff]
    %v20 = vld [vmem:[%s0 + $0x8] sm:$0xff]
    %v21 = vld [vmem:[%s0 + $0x10] sm:$0xff]
    %v22 = vld [vmem:[%s0 + $0x18] sm:$0xff]
    %v23 = vld [vmem:[%s0 + $0x20] sm:$0xff]
    %v24 = vld [vmem:[%s0 + $0x28] sm:$0xff]
    %v25 = vld [vmem:[%s0 + $0x30] sm:$0xff]
    %v26 = vld [vmem:[%s0 + $0x38] sm:$0xff]
    %v27 = vld [vmem:[%s0 + $0x40] sm:$0xff]
    %v28 = vld [vmem:[%s0 + $0x48] sm:$0xff]
    %v29 = vld [vmem:[%s0 + $0x50] sm:$0xff]
    %v30 = vld [vmem:[%s0 + $0x58] sm:$0xff]
    %v31 = vld [vmem:[%s0 + $0x60] sm:$0xff]
    %v32 = vld [vmem:[%s0 + $0x68] sm:$0xff]
    %v33 = vld [vmem:[%s0 + $0x70] sm:$0xff]
    %v34 = vld [vmem:[%s0 + $0x78] sm:$0xff]
    %v51 = vcombine.low %v19, %v21
    %v52 = vcombine.high %v19, %v21
    %v53 = vcombine.low %v23, %v25
    %v54 = vcombine.high %v23, %v25
    %v56 = vunpack.c.l.s4 1983009808
    %v57 = vunpack.c.0.s8 %v56
    %v58 = vlaneseq
    %v59 = vshrl.u32 %v58, 7
    %v60 = vsub.s32 %v57, %v59
    %v61 = vrot.slane %v51, %v60
    %v63 = vunpack.c.l.s4 1983009808
    %v64 = vunpack.c.0.s8 %v63
    %v65 = vlaneseq
    %v66 = vshrl.u32 %v65, 7
    %v67 = vsub.s32 %v64, %v66
    %v68 = vrot.slane %v52, %v67
    %v70 = vunpack.c.l.s4 1983009808
    %v71 = vunpack.c.0.s8 %v70
    %v72 = vlaneseq
    %v73 = vshrl.u32 %v72, 7
    %v74 = vsub.s32 %v71, %v73
    %v75 = vrot.slane %v53, %v74
    %v77 = vunpack.c.l.s4 1983009808
    %v78 = vunpack.c.0.s8 %v77
    %v79 = vlaneseq
    %v80 = vshrl.u32 %v79, 7
    %v81 = vsub.s32 %v78, %v80
    %v82 = vrot.slane %v54, %v81
    %v83 = vcombine.low %v61, %v75
    %v84 = vcombine.high %v61, %v75
    %v85 = vcombine.low %v68, %v82
    %v86 = vcombine.high %v68, %v82
    %v87 = vcombine.low %v20, %v22
    %v88 = vcombine.high %v20, %v22
    %v89 = vcombine.low %v24, %v26
    %v90 = vcombine.high %v24, %v26
    %v92 = vunpack.c.l.s4 1983009808
    %v93 = vunpack.c.0.s8 %v92
    %v94 = vlaneseq
    %v95 = vshrl.u32 %v94, 7
    %v96 = vsub.s32 %v93, %v95
    %v97 = vrot.slane %v87, %v96
    %v99 = vunpack.c.l.s4 1983009808
    %v100 = vunpack.c.0.s8 %v99
    %v101 = vlaneseq
    %v102 = vshrl.u32 %v101, 7
    %v103 = vsub.s32 %v100, %v102
    %v104 = vrot.slane %v88, %v103
    %v106 = vunpack.c.l.s4 1983009808
    %v107 = vunpack.c.0.s8 %v106
    %v108 = vlaneseq
    %v109 = vshrl.u32 %v108, 7
    %v110 = vsub.s32 %v107, %v109
    %v111 = vrot.slane %v89, %v110
    %v113 = vunpack.c.l.s4 1983009808
    %v114 = vunpack.c.0.s8 %v113
    %v115 = vlaneseq
    %v116 = vshrl.u32 %v115, 7
    %v117 = vsub.s32 %v114, %v116
    %v118 = vrot.slane %v90, %v117
    %v119 = vcombine.low %v97, %v111
    %v120 = vcombine.high %v97, %v111
    %v121 = vcombine.low %v104, %v118
    %v122 = vcombine.high %v104, %v118
    %v123 = vcombine.low %v27, %v29
    %v124 = vcombine.high %v27, %v29
    %v125 = vcombine.low %v31, %v33
    %v126 = vcombine.high %v31, %v33
    %v128 = vunpack.c.l.s4 1983009808
    %v129 = vunpack.c.0.s8 %v128
    %v130 = vlaneseq
    %v131 = vshrl.u32 %v130, 7
    %v132 = vsub.s32 %v129, %v131
    %v133 = vrot.slane %v123, %v132
    %v135 = vunpack.c.l.s4 1983009808
    %v136 = vunpack.c.0.s8 %v135
    %v137 = vlaneseq
    %v138 = vshrl.u32 %v137, 7
    %v139 = vsub.s32 %v136, %v138
    %v140 = vrot.slane %v124, %v139
    %v142 = vunpack.c.l.s4 1983009808
    %v143 = vunpack.c.0.s8 %v142
    %v144 = vlaneseq
    %v145 = vshrl.u32 %v144, 7
    %v146 = vsub.s32 %v143, %v145
    %v147 = vrot.slane %v125, %v146
    %v149 = vunpack.c.l.s4 1983009808
    %v150 = vunpack.c.0.s8 %v149
    %v151 = vlaneseq
    %v152 = vshrl.u32 %v151, 7
    %v153 = vsub.s32 %v150, %v152
    %v154 = vrot.slane %v126, %v153
    %v155 = vcombine.low %v133, %v147
    %v156 = vcombine.high %v133, %v147
    %v157 = vcombine.low %v140, %v154
    %v158 = vcombine.high %v140, %v154
    %v159 = vcombine.low %v28, %v30
    %v160 = vcombine.high %v28, %v30
    %v161 = vcombine.low %v32, %v34
    %v162 = vcombine.high %v32, %v34
    %v164 = vunpack.c.l.s4 1983009808
    %v165 = vunpack.c.0.s8 %v164
    %v166 = vlaneseq
    %v167 = vshrl.u32 %v166, 7
    %v168 = vsub.s32 %v165, %v167
    %v169 = vrot.slane %v159, %v168
    %v171 = vunpack.c.l.s4 1983009808
    %v172 = vunpack.c.0.s8 %v171
    %v173 = vlaneseq
    %v174 = vshrl.u32 %v173, 7
    %v175 = vsub.s32 %v172, %v174
    %v176 = vrot.slane %v160, %v175
    %v178 = vunpack.c.l.s4 1983009808
    %v179 = vunpack.c.0.s8 %v178
    %v180 = vlaneseq
    %v181 = vshrl.u32 %v180, 7
    %v182 = vsub.s32 %v179, %v181
    %v183 = vrot.slane %v161, %v182
    %v185 = vunpack.c.l.s4 1983009808
    %v186 = vunpack.c.0.s8 %v185
    %v187 = vlaneseq
    %v188 = vshrl.u32 %v187, 7
    %v189 = vsub.s32 %v186, %v188
    %v190 = vrot.slane %v162, %v189
    %v191 = vcombine.low %v169, %v183
    %v192 = vcombine.high %v169, %v183
    %v193 = vcombine.low %v176, %v190
    %v194 = vcombine.high %v176, %v190
    %v211 = vpack.c.bf16 %v155, %v83
    %v212 = vpack.c.bf16 %v156, %v84
    %v213 = vpack.c.bf16 %v157, %v85
    %v214 = vpack.c.bf16 %v158, %v86
    %v215 = vpack.c.bf16 %v191, %v119
    %v216 = vpack.c.bf16 %v192, %v120
    %v217 = vpack.c.bf16 %v193, %v121
    %v218 = vpack.c.bf16 %v194, %v122
    %v219 = vld [vmem:[%s1] sm:$0xf]
    %v220 = vld [vmem:[%s1 + $0x4] sm:$0xf]
    %v221 = vld [vmem:[%s1 + $0x8] sm:$0xf]
    %v222 = vld [vmem:[%s1 + $0xc] sm:$0xf]
    %v223 = vld [vmem:[%s1 + $0x10] sm:$0xf]
    %v224 = vld [vmem:[%s1 + $0x14] sm:$0xf]
    %v225 = vld [vmem:[%s1 + $0x18] sm:$0xf]
    %v226 = vld [vmem:[%s1 + $0x1c] sm:$0xf]
    %v227 = vld [vmem:[%s1 + $0x20] sm:$0xf]
    %v228 = vld [vmem:[%s1 + $0x24] sm:$0xf]
    %v229 = vld [vmem:[%s1 + $0x28] sm:$0xf]
    %v230 = vld [vmem:[%s1 + $0x2c] sm:$0xf]
    %v231 = vld [vmem:[%s1 + $0x30] sm:$0xf]
    %v232 = vld [vmem:[%s1 + $0x34] sm:$0xf]
    %v233 = vld [vmem:[%s1 + $0x38] sm:$0xf]
    %v234 = vld [vmem:[%s1 + $0x3c] sm:$0xf]
    %v235 = vld [vmem:[%s1 + $0x40] sm:$0xf]
    %v236 = vld [vmem:[%s1 + $0x44] sm:$0xf]
    %v237 = vld [vmem:[%s1 + $0x48] sm:$0xf]
    %v238 = vld [vmem:[%s1 + $0x4c] sm:$0xf]
    %v239 = vld [vmem:[%s1 + $0x50] sm:$0xf]
    %v240 = vld [vmem:[%s1 + $0x54] sm:$0xf]
    %v241 = vld [vmem:[%s1 + $0x58] sm:$0xf]
    %v242 = vld [vmem:[%s1 + $0x5c] sm:$0xf]
    %v243 = vld [vmem:[%s1 + $0x60] sm:$0xf]
    %v244 = vld [vmem:[%s1 + $0x64] sm:$0xf]
    %v245 = vld [vmem:[%s1 + $0x68] sm:$0xf]
    %v246 = vld [vmem:[%s1 + $0x6c] sm:$0xf]
    %v247 = vld [vmem:[%s1 + $0x70] sm:$0xf]
    %v248 = vld [vmem:[%s1 + $0x74] sm:$0xf]
    %v249 = vld [vmem:[%s1 + $0x78] sm:$0xf]
    %v250 = vld [vmem:[%s1 + $0x7c] sm:$0xf]
    %v251 = vld [vmem:[%s1 + $0x80] sm:$0xf]
    %v252 = vld [vmem:[%s1 + $0x84] sm:$0xf]
    %v253 = vld [vmem:[%s1 + $0x88] sm:$0xf]
    %v254 = vld [vmem:[%s1 + $0x8c] sm:$0xf]
    %v255 = vld [vmem:[%s1 + $0x90] sm:$0xf]
    %v256 = vld [vmem:[%s1 + $0x94] sm:$0xf]
    %v257 = vld [vmem:[%s1 + $0x98] sm:$0xf]
    %v258 = vld [vmem:[%s1 + $0x9c] sm:$0xf]
    %v259 = vld [vmem:[%s1 + $0xa0] sm:$0xf]
    %v260 = vld [vmem:[%s1 + $0xa4] sm:$0xf]
    %v261 = vld [vmem:[%s1 + $0xa8] sm:$0xf]
    %v262 = vld [vmem:[%s1 + $0xac] sm:$0xf]
    %v263 = vld [vmem:[%s1 + $0xb0] sm:$0xf]
    %v264 = vld [vmem:[%s1 + $0xb4] sm:$0xf]
    %v265 = vld [vmem:[%s1 + $0xb8] sm:$0xf]
    %v266 = vld [vmem:[%s1 + $0xbc] sm:$0xf]
    %v267 = vld [vmem:[%s1 + $0xc0] sm:$0xf]
    %v268 = vld [vmem:[%s1 + $0xc4] sm:$0xf]
    %v269 = vld [vmem:[%s1 + $0xc8] sm:$0xf]
    %v270 = vld [vmem:[%s1 + $0xcc] sm:$0xf]
    %v271 = vld [vmem:[%s1 + $0xd0] sm:$0xf]
    %v272 = vld [vmem:[%s1 + $0xd4] sm:$0xf]
    %v273 = vld [vmem:[%s1 + $0xd8] sm:$0xf]
    %v274 = vld [vmem:[%s1 + $0xdc] sm:$0xf]
    %v275 = vld [vmem:[%s1 + $0xe0] sm:$0xf]
    %v276 = vld [vmem:[%s1 + $0xe4] sm:$0xf]
    %v277 = vld [vmem:[%s1 + $0xe8] sm:$0xf]
    %v278 = vld [vmem:[%s1 + $0xec] sm:$0xf]
    %v279 = vld [vmem:[%s1 + $0xf0] sm:$0xf]
    %v280 = vld [vmem:[%s1 + $0xf4] sm:$0xf]
    %v281 = vld [vmem:[%s1 + $0xf8] sm:$0xf]
    %v282 = vld [vmem:[%s1 + $0xfc] sm:$0xf]
    %v283 = vld [vmem:[%s1 + $0x100] sm:$0xf]
    %v284 = vld [vmem:[%s1 + $0x104] sm:$0xf]
    %v285 = vld [vmem:[%s1 + $0x108] sm:$0xf]
    %v286 = vld [vmem:[%s1 + $0x10c] sm:$0xf]
    %v287 = vld [vmem:[%s1 + $0x110] sm:$0xf]
    %v288 = vld [vmem:[%s1 + $0x114] sm:$0xf]
    %v289 = vld [vmem:[%s1 + $0x118] sm:$0xf]
    %v290 = vld [vmem:[%s1 + $0x11c] sm:$0xf]
    %v291 = vld [vmem:[%s1 + $0x120] sm:$0xf]
    %v292 = vld [vmem:[%s1 + $0x124] sm:$0xf]
    %v293 = vld [vmem:[%s1 + $0x128] sm:$0xf]
    %v294 = vld [vmem:[%s1 + $0x12c] sm:$0xf]
    %v295 = vld [vmem:[%s1 + $0x130] sm:$0xf]
    %v296 = vld [vmem:[%s1 + $0x134] sm:$0xf]
    %v297 = vld [vmem:[%s1 + $0x138] sm:$0xf]
    %v298 = vld [vmem:[%s1 + $0x13c] sm:$0xf]
    %v299 = vld [vmem:[%s1 + $0x140] sm:$0xf]
    %v300 = vld [vmem:[%s1 + $0x144] sm:$0xf]
    %v301 = vld [vmem:[%s1 + $0x148] sm:$0xf]
    %v302 = vld [vmem:[%s1 + $0x14c] sm:$0xf]
    %v303 = vld [vmem:[%s1 + $0x150] sm:$0xf]
    %v304 = vld [vmem:[%s1 + $0x154] sm:$0xf]
    %v305 = vld [vmem:[%s1 + $0x158] sm:$0xf]
    %v306 = vld [vmem:[%s1 + $0x15c] sm:$0xf]
    %v307 = vld [vmem:[%s1 + $0x160] sm:$0xf]
    %v308 = vld [vmem:[%s1 + $0x164] sm:$0xf]
    %v309 = vld [vmem:[%s1 + $0x168] sm:$0xf]
    %v310 = vld [vmem:[%s1 + $0x16c] sm:$0xf]
    %v311 = vld [vmem:[%s1 + $0x170] sm:$0xf]
    %v312 = vld [vmem:[%s1 + $0x174] sm:$0xf]
    %v313 = vld [vmem:[%s1 + $0x178] sm:$0xf]
    %v314 = vld [vmem:[%s1 + $0x17c] sm:$0xf]
    %v315 = vld [vmem:[%s1 + $0x180] sm:$0xf]
    %v316 = vld [vmem:[%s1 + $0x184] sm:$0xf]
    %v317 = vld [vmem:[%s1 + $0x188] sm:$0xf]
    %v318 = vld [vmem:[%s1 + $0x18c] sm:$0xf]
    %v319 = vld [vmem:[%s1 + $0x190] sm:$0xf]
    %v320 = vld [vmem:[%s1 + $0x194] sm:$0xf]
    %v321 = vld [vmem:[%s1 + $0x198] sm:$0xf]
    %v322 = vld [vmem:[%s1 + $0x19c] sm:$0xf]
    %v323 = vld [vmem:[%s1 + $0x1a0] sm:$0xf]
    %v324 = vld [vmem:[%s1 + $0x1a4] sm:$0xf]
    %v325 = vld [vmem:[%s1 + $0x1a8] sm:$0xf]
    %v326 = vld [vmem:[%s1 + $0x1ac] sm:$0xf]
    %v327 = vld [vmem:[%s1 + $0x1b0] sm:$0xf]
    %v328 = vld [vmem:[%s1 + $0x1b4] sm:$0xf]
    %v329 = vld [vmem:[%s1 + $0x1b8] sm:$0xf]
    %v330 = vld [vmem:[%s1 + $0x1bc] sm:$0xf]
    %v331 = vld [vmem:[%s1 + $0x1c0] sm:$0xf]
    %v332 = vld [vmem:[%s1 + $0x1c4] sm:$0xf]
    %v333 = vld [vmem:[%s1 + $0x1c8] sm:$0xf]
    %v334 = vld [vmem:[%s1 + $0x1cc] sm:$0xf]
    %v335 = vld [vmem:[%s1 + $0x1d0] sm:$0xf]
    %v336 = vld [vmem:[%s1 + $0x1d4] sm:$0xf]
    %v337 = vld [vmem:[%s1 + $0x1d8] sm:$0xf]
    %v338 = vld [vmem:[%s1 + $0x1dc] sm:$0xf]
    %v339 = vld [vmem:[%s1 + $0x1e0] sm:$0xf]
    %v340 = vld [vmem:[%s1 + $0x1e4] sm:$0xf]
    %v341 = vld [vmem:[%s1 + $0x1e8] sm:$0xf]
    %v342 = vld [vmem:[%s1 + $0x1ec] sm:$0xf]
    %v343 = vld [vmem:[%s1 + $0x1f0] sm:$0xf]
    %v344 = vld [vmem:[%s1 + $0x1f4] sm:$0xf]
    %v345 = vld [vmem:[%s1 + $0x1f8] sm:$0xf]
    %v346 = vld [vmem:[%s1 + $0x1fc] sm:$0xf]
    %v475 = vunpack.c.l.b16 %v219
    %v476 = vunpack.c.l.b16 %v220
    %v477 = vunpack.c.l.b16 %v221
    %v478 = vunpack.c.l.b16 %v222
    %v479 = vunpack.c.l.b16 %v223
    %v480 = vunpack.c.l.b16 %v224
    %v481 = vunpack.c.l.b16 %v225
    %v482 = vunpack.c.l.b16 %v226
    %v483 = vunpack.c.l.b16 %v227
    %v484 = vunpack.c.l.b16 %v228
    %v485 = vunpack.c.l.b16 %v229
    %v486 = vunpack.c.l.b16 %v230
    %v487 = vunpack.c.l.b16 %v231
    %v488 = vunpack.c.l.b16 %v232
    %v489 = vunpack.c.l.b16 %v233
    %v490 = vunpack.c.l.b16 %v234
    %v491 = vunpack.c.l.b16 %v235
    %v492 = vunpack.c.l.b16 %v236
    %v493 = vunpack.c.l.b16 %v237
    %v494 = vunpack.c.l.b16 %v238
    %v495 = vunpack.c.l.b16 %v239
    %v496 = vunpack.c.l.b16 %v240
    %v497 = vunpack.c.l.b16 %v241
    %v498 = vunpack.c.l.b16 %v242
    %v499 = vunpack.c.l.b16 %v243
    %v500 = vunpack.c.l.b16 %v244
    %v501 = vunpack.c.l.b16 %v245
    %v502 = vunpack.c.l.b16 %v246
    %v503 = vunpack.c.l.b16 %v247
    %v504 = vunpack.c.l.b16 %v248
    %v505 = vunpack.c.l.b16 %v249
    %v506 = vunpack.c.l.b16 %v250
    %v507 = vunpack.c.l.b16 %v251
    %v508 = vunpack.c.l.b16 %v252
    %v509 = vunpack.c.l.b16 %v253
    %v510 = vunpack.c.l.b16 %v254
    %v511 = vunpack.c.l.b16 %v255
    %v512 = vunpack.c.l.b16 %v256
    %v513 = vunpack.c.l.b16 %v257
    %v514 = vunpack.c.l.b16 %v258
    %v515 = vunpack.c.l.b16 %v259
    %v516 = vunpack.c.l.b16 %v260
    %v517 = vunpack.c.l.b16 %v261
    %v518 = vunpack.c.l.b16 %v262
    %v519 = vunpack.c.l.b16 %v263
    %v520 = vunpack.c.l.b16 %v264
    %v521 = vunpack.c.l.b16 %v265
    %v522 = vunpack.c.l.b16 %v266
    %v523 = vunpack.c.l.b16 %v267
    %v524 = vunpack.c.l.b16 %v268
    %v525 = vunpack.c.l.b16 %v269
    %v526 = vunpack.c.l.b16 %v270
    %v527 = vunpack.c.l.b16 %v271
    %v528 = vunpack.c.l.b16 %v272
    %v529 = vunpack.c.l.b16 %v273
    %v530 = vunpack.c.l.b16 %v274
    %v531 = vunpack.c.l.b16 %v275
    %v532 = vunpack.c.l.b16 %v276
    %v533 = vunpack.c.l.b16 %v277
    %v534 = vunpack.c.l.b16 %v278
    %v535 = vunpack.c.l.b16 %v279
    %v536 = vunpack.c.l.b16 %v280
    %v537 = vunpack.c.l.b16 %v281
    %v538 = vunpack.c.l.b16 %v282
    %v539 = vunpack.c.l.b16 %v283
    %v540 = vunpack.c.l.b16 %v284
    %v541 = vunpack.c.l.b16 %v285
    %v542 = vunpack.c.l.b16 %v286
    %v543 = vunpack.c.l.b16 %v287
    %v544 = vunpack.c.l.b16 %v288
    %v545 = vunpack.c.l.b16 %v289
    %v546 = vunpack.c.l.b16 %v290
    %v547 = vunpack.c.l.b16 %v291
    %v548 = vunpack.c.l.b16 %v292
    %v549 = vunpack.c.l.b16 %v293
    %v550 = vunpack.c.l.b16 %v294
    %v551 = vunpack.c.l.b16 %v295
    %v552 = vunpack.c.l.b16 %v296
    %v553 = vunpack.c.l.b16 %v297
    %v554 = vunpack.c.l.b16 %v298
    %v555 = vunpack.c.l.b16 %v299
    %v556 = vunpack.c.l.b16 %v300
    %v557 = vunpack.c.l.b16 %v301
    %v558 = vunpack.c.l.b16 %v302
    %v559 = vunpack.c.l.b16 %v303
    %v560 = vunpack.c.l.b16 %v304
    %v561 = vunpack.c.l.b16 %v305
    %v562 = vunpack.c.l.b16 %v306
    %v563 = vunpack.c.l.b16 %v307
    %v564 = vunpack.c.l.b16 %v308
    %v565 = vunpack.c.l.b16 %v309
    %v566 = vunpack.c.l.b16 %v310
    %v567 = vunpack.c.l.b16 %v311
    %v568 = vunpack.c.l.b16 %v312
    %v569 = vunpack.c.l.b16 %v313
    %v570 = vunpack.c.l.b16 %v314
    %v571 = vunpack.c.l.b16 %v315
    %v572 = vunpack.c.l.b16 %v316
    %v573 = vunpack.c.l.b16 %v317
    %v574 = vunpack.c.l.b16 %v318
    %v575 = vunpack.c.l.b16 %v319
    %v576 = vunpack.c.l.b16 %v320
    %v577 = vunpack.c.l.b16 %v321
    %v578 = vunpack.c.l.b16 %v322
    %v579 = vunpack.c.l.b16 %v323
    %v580 = vunpack.c.l.b16 %v324
    %v581 = vunpack.c.l.b16 %v325
    %v582 = vunpack.c.l.b16 %v326
    %v583 = vunpack.c.l.b16 %v327
    %v584 = vunpack.c.l.b16 %v328
    %v585 = vunpack.c.l.b16 %v329
    %v586 = vunpack.c.l.b16 %v330
    %v587 = vunpack.c.l.b16 %v331
    %v588 = vunpack.c.l.b16 %v332
    %v589 = vunpack.c.l.b16 %v333
    %v590 = vunpack.c.l.b16 %v334
    %v591 = vunpack.c.l.b16 %v335
    %v592 = vunpack.c.l.b16 %v336
    %v593 = vunpack.c.l.b16 %v337
    %v594 = vunpack.c.l.b16 %v338
    %v595 = vunpack.c.l.b16 %v339
    %v596 = vunpack.c.l.b16 %v340
    %v597 = vunpack.c.l.b16 %v341
    %v598 = vunpack.c.l.b16 %v342
    %v599 = vunpack.c.l.b16 %v343
    %v600 = vunpack.c.l.b16 %v344
    %v601 = vunpack.c.l.b16 %v345
    %v602 = vunpack.c.l.b16 %v346
    %v603 = vpack.c.b16 %v476, %v475
    %v604 = vpack.c.b16 %v478, %v477
    %v605 = vpack.c.b16 %v480, %v479
    %v606 = vpack.c.b16 %v482, %v481
    %v607 = vpack.c.b16 %v484, %v483
    %v608 = vpack.c.b16 %v486, %v485
    %v609 = vpack.c.b16 %v488, %v487
    %v610 = vpack.c.b16 %v490, %v489
    %v611 = vpack.c.b16 %v492, %v491
    %v612 = vpack.c.b16 %v494, %v493
    %v613 = vpack.c.b16 %v496, %v495
    %v614 = vpack.c.b16 %v498, %v497
    %v615 = vpack.c.b16 %v500, %v499
    %v616 = vpack.c.b16 %v502, %v501
    %v617 = vpack.c.b16 %v504, %v503
    %v618 = vpack.c.b16 %v506, %v505
    %v619 = vpack.c.b16 %v508, %v507
    %v620 = vpack.c.b16 %v510, %v509
    %v621 = vpack.c.b16 %v512, %v511
    %v622 = vpack.c.b16 %v514, %v513
    %v623 = vpack.c.b16 %v516, %v515
    %v624 = vpack.c.b16 %v518, %v517
    %v625 = vpack.c.b16 %v520, %v519
    %v626 = vpack.c.b16 %v522, %v521
    %v627 = vpack.c.b16 %v524, %v523
    %v628 = vpack.c.b16 %v526, %v525
    %v629 = vpack.c.b16 %v528, %v527
    %v630 = vpack.c.b16 %v530, %v529
    %v631 = vpack.c.b16 %v532, %v531
    %v632 = vpack.c.b16 %v534, %v533
    %v633 = vpack.c.b16 %v536, %v535
    %v634 = vpack.c.b16 %v538, %v537
    %v635 = vpack.c.b16 %v540, %v539
    %v636 = vpack.c.b16 %v542, %v541
    %v637 = vpack.c.b16 %v544, %v543
    %v638 = vpack.c.b16 %v546, %v545
    %v639 = vpack.c.b16 %v548, %v547
    %v640 = vpack.c.b16 %v550, %v549
    %v641 = vpack.c.b16 %v552, %v551
    %v642 = vpack.c.b16 %v554, %v553
    %v643 = vpack.c.b16 %v556, %v555
    %v644 = vpack.c.b16 %v558, %v557
    %v645 = vpack.c.b16 %v560, %v559
    %v646 = vpack.c.b16 %v562, %v561
    %v647 = vpack.c.b16 %v564, %v563
    %v648 = vpack.c.b16 %v566, %v565
    %v649 = vpack.c.b16 %v568, %v567
    %v650 = vpack.c.b16 %v570, %v569
    %v651 = vpack.c.b16 %v572, %v571
    %v652 = vpack.c.b16 %v574, %v573
    %v653 = vpack.c.b16 %v576, %v575
    %v654 = vpack.c.b16 %v578, %v577
    %v655 = vpack.c.b16 %v580, %v579
    %v656 = vpack.c.b16 %v582, %v581
    %v657 = vpack.c.b16 %v584, %v583
    %v658 = vpack.c.b16 %v586, %v585
    %v659 = vpack.c.b16 %v588, %v587
    %v660 = vpack.c.b16 %v590, %v589
    %v661 = vpack.c.b16 %v592, %v591
    %v662 = vpack.c.b16 %v594, %v593
    %v663 = vpack.c.b16 %v596, %v595
    %v664 = vpack.c.b16 %v598, %v597
    %v665 = vpack.c.b16 %v600, %v599
    %v666 = vpack.c.b16 %v602, %v601
    %731 = vmatprep.subr.bf16.mxu0 0
    %732 = vmatpush1.bf16.msra.mxu0 %v610
    %733 = vmatprep.subr.bf16.mxu0 0
    %734 = vmatpush1.bf16.msra.mxu0 %v609
    %735 = vmatprep.subr.bf16.mxu0 0
    %736 = vmatpush1.bf16.msra.mxu0 %v608
    %737 = vmatprep.subr.bf16.mxu0 0
    %738 = vmatpush1.bf16.msra.mxu0 %v607
    %739 = vmatprep.subr.bf16.mxu0 0
    %740 = vmatpush1.bf16.msra.mxu0 %v606
    %741 = vmatprep.subr.bf16.mxu0 0
    %742 = vmatpush1.bf16.msra.mxu0 %v605
    %743 = vmatprep.subr.bf16.mxu0 0
    %744 = vmatpush1.bf16.msra.mxu0 %v604
    %745 = vmatprep.subr.bf16.mxu0 0
    %746 = vmatpush1.bf16.msra.mxu0 %v603
    %747 = vmatprep.subr.bf16.mxu0 0
    %748 = vmatpush2.bf16.msra.mxu0 %v618
    %749 = vmatprep.subr.bf16.mxu0 0
    %750 = vmatpush2.bf16.msra.mxu0 %v617
    %751 = vmatprep.subr.bf16.mxu0 0
    %752 = vmatpush2.bf16.msra.mxu0 %v616
    %753 = vmatprep.subr.bf16.mxu0 0
    %754 = vmatpush2.bf16.msra.mxu0 %v615
    %755 = vmatprep.subr.bf16.mxu0 0
    %756 = vmatpush2.bf16.msra.mxu0 %v614
    %757 = vmatprep.subr.bf16.mxu0 0
    %758 = vmatpush2.bf16.msra.mxu0 %v613
    %759 = vmatprep.subr.bf16.mxu0 0
    %760 = vmatpush2.bf16.msra.mxu0 %v612
    %761 = vmatprep.subr.bf16.mxu0 0
    %762 = vmatpush2.bf16.msra.mxu0 %v611
    %763 = vmatprep.mubr.bf16.mxu0 %v212
    %764 = vmatmul.mubr.bf16.gmra.mxu0 %v211
    %v765 = vpop.f32.mrf.mxu0
    %v766 = vadd.f32 0.0, %v765
    %v767 = vpop.f32.mrf.mxu0
    %v768 = vpop.f32.mrf.mxu0
    %v769 = vadd.f32 0.0, %v768
    %v770 = vpop.f32.mrf.mxu0
    %771 = vdwg.mxu0
    %772 = vmatprep.subr.bf16.mxu0 0
    %773 = vmatpush1.bf16.msra.mxu0 %v626
    %774 = vmatprep.subr.bf16.mxu0 0
    %775 = vmatpush1.bf16.msra.mxu0 %v625
    %776 = vmatprep.subr.bf16.mxu0 0
    %777 = vmatpush1.bf16.msra.mxu0 %v624
    %778 = vmatprep.subr.bf16.mxu0 0
    %779 = vmatpush1.bf16.msra.mxu0 %v623
    %780 = vmatprep.subr.bf16.mxu0 0
    %781 = vmatpush1.bf16.msra.mxu0 %v622
    %782 = vmatprep.subr.bf16.mxu0 0
    %783 = vmatpush1.bf16.msra.mxu0 %v621
    %784 = vmatprep.subr.bf16.mxu0 0
    %785 = vmatpush1.bf16.msra.mxu0 %v620
    %786 = vmatprep.subr.bf16.mxu0 0
    %787 = vmatpush1.bf16.msra.mxu0 %v619
    %788 = vmatprep.subr.bf16.mxu0 0
    %789 = vmatpush2.bf16.msra.mxu0 %v634
    %790 = vmatprep.subr.bf16.mxu0 0
    %791 = vmatpush2.bf16.msra.mxu0 %v633
    %792 = vmatprep.subr.bf16.mxu0 0
    %793 = vmatpush2.bf16.msra.mxu0 %v632
    %794 = vmatprep.subr.bf16.mxu0 0
    %795 = vmatpush2.bf16.msra.mxu0 %v631
    %796 = vmatprep.subr.bf16.mxu0 0
    %797 = vmatpush2.bf16.msra.mxu0 %v630
    %798 = vmatprep.subr.bf16.mxu0 0
    %799 = vmatpush2.bf16.msra.mxu0 %v629
    %800 = vmatprep.subr.bf16.mxu0 0
    %801 = vmatpush2.bf16.msra.mxu0 %v628
    %802 = vmatprep.subr.bf16.mxu0 0
    %803 = vmatpush2.bf16.msra.mxu0 %v627
    %804 = vmatprep.mubr.bf16.mxu0 %v214
    %805 = vmatmul.mubr.bf16.gmra.mxu0 %v213
    %v806 = vpop.f32.mrf.mxu0
    %v807 = vadd.f32 %v766, %v806
    %v808 = vpop.f32.mrf.mxu0
    %v809 = vpop.f32.mrf.mxu0
    %v810 = vadd.f32 %v769, %v809
    %v811 = vpop.f32.mrf.mxu0
    %812 = vdwg.mxu0
    %813 = vmatprep.subr.bf16.mxu0 0
    %814 = vmatpush1.bf16.msra.mxu0 %v642
    %815 = vmatprep.subr.bf16.mxu0 0
    %816 = vmatpush1.bf16.msra.mxu0 %v641
    %817 = vmatprep.subr.bf16.mxu0 0
    %818 = vmatpush1.bf16.msra.mxu0 %v640
    %819 = vmatprep.subr.bf16.mxu0 0
    %820 = vmatpush1.bf16.msra.mxu0 %v639
    %821 = vmatprep.subr.bf16.mxu0 0
    %822 = vmatpush1.bf16.msra.mxu0 %v638
    %823 = vmatprep.subr.bf16.mxu0 0
    %824 = vmatpush1.bf16.msra.mxu0 %v637
    %825 = vmatprep.subr.bf16.mxu0 0
    %826 = vmatpush1.bf16.msra.mxu0 %v636
    %827 = vmatprep.subr.bf16.mxu0 0
    %828 = vmatpush1.bf16.msra.mxu0 %v635
    %829 = vmatprep.subr.bf16.mxu0 0
    %830 = vmatpush2.bf16.msra.mxu0 %v650
    %831 = vmatprep.subr.bf16.mxu0 0
    %832 = vmatpush2.bf16.msra.mxu0 %v649
    %833 = vmatprep.subr.bf16.mxu0 0
    %834 = vmatpush2.bf16.msra.mxu0 %v648
    %835 = vmatprep.subr.bf16.mxu0 0
    %836 = vmatpush2.bf16.msra.mxu0 %v647
    %837 = vmatprep.subr.bf16.mxu0 0
    %838 = vmatpush2.bf16.msra.mxu0 %v646
    %839 = vmatprep.subr.bf16.mxu0 0
    %840 = vmatpush2.bf16.msra.mxu0 %v645
    %841 = vmatprep.subr.bf16.mxu0 0
    %842 = vmatpush2.bf16.msra.mxu0 %v644
    %843 = vmatprep.subr.bf16.mxu0 0
    %844 = vmatpush2.bf16.msra.mxu0 %v643
    %845 = vmatprep.mubr.bf16.mxu0 %v216
    %846 = vmatmul.mubr.bf16.gmra.mxu0 %v215
    %v847 = vpop.f32.mrf.mxu0
    %v848 = vadd.f32 %v807, %v847
    %v849 = vpop.f32.mrf.mxu0
    %v850 = vpop.f32.mrf.mxu0
    %v851 = vadd.f32 %v810, %v850
    %v852 = vpop.f32.mrf.mxu0
    %853 = vdwg.mxu0
    %854 = vmatprep.subr.bf16.mxu0 0
    %855 = vmatpush1.bf16.msra.mxu0 %v658
    %856 = vmatprep.subr.bf16.mxu0 0
    %857 = vmatpush1.bf16.msra.mxu0 %v657
    %858 = vmatprep.subr.bf16.mxu0 0
    %859 = vmatpush1.bf16.msra.mxu0 %v656
    %860 = vmatprep.subr.bf16.mxu0 0
    %861 = vmatpush1.bf16.msra.mxu0 %v655
    %862 = vmatprep.subr.bf16.mxu0 0
    %863 = vmatpush1.bf16.msra.mxu0 %v654
    %864 = vmatprep.subr.bf16.mxu0 0
    %865 = vmatpush1.bf16.msra.mxu0 %v653
    %866 = vmatprep.subr.bf16.mxu0 0
    %867 = vmatpush1.bf16.msra.mxu0 %v652
    %868 = vmatprep.subr.bf16.mxu0 0
    %869 = vmatpush1.bf16.msra.mxu0 %v651
    %870 = vmatprep.subr.bf16.mxu0 0
    %871 = vmatpush2.bf16.msra.mxu0 %v666
    %872 = vmatprep.subr.bf16.mxu0 0
    %873 = vmatpush2.bf16.msra.mxu0 %v665
    %874 = vmatprep.subr.bf16.mxu0 0
    %875 = vmatpush2.bf16.msra.mxu0 %v664
    %876 = vmatprep.subr.bf16.mxu0 0
    %877 = vmatpush2.bf16.msra.mxu0 %v663
    %878 = vmatprep.subr.bf16.mxu0 0
    %879 = vmatpush2.bf16.msra.mxu0 %v662
    %880 = vmatprep.subr.bf16.mxu0 0
    %881 = vmatpush2.bf16.msra.mxu0 %v661
    %882 = vmatprep.subr.bf16.mxu0 0
    %883 = vmatpush2.bf16.msra.mxu0 %v660
    %884 = vmatprep.subr.bf16.mxu0 0
    %885 = vmatpush2.bf16.msra.mxu0 %v659
    %886 = vmatprep.mubr.bf16.mxu0 %v218
    %887 = vmatmul.mubr.bf16.gmra.mxu0 %v217
    %v888 = vpop.f32.mrf.mxu0
    %v889 = vadd.f32 %v848, %v888
    %v890 = vpop.f32.mrf.mxu0
    %v891 = vpop.f32.mrf.mxu0
    %v892 = vadd.f32 %v851, %v891
    %v893 = vpop.f32.mrf.mxu0
    %894 = vdwg.mxu0
    %v895 = vlaneseq
    %v896 = vshrl.u32 %v895, 7
    %v897 = vsub.s32 0, %v896
    %v898 = vrot.slane %v18, %v897
    %v899 = vmul.f32 %v889, %v898
    %v900 = vmul.f32 %v892, %v898
    %v901 = vld [vmem:[%s3] sm:$0x1]
    %v902 = vlaneseq
    %v903 = vshrl.u32 %v902, 7
    %v904 = vsub.s32 0, %v903
    %v905 = vrot.slane %v901, %v904
    %v906 = vadd.f32 %v899, %v905
    %v907 = vadd.f32 %v900, %v905
    %v908 = vmax.f32 %v906, 0.0
    %v909 = vmax.f32 %v907, 0.0
    %v910 = vpack.c.bf16 %v909, %v908
    %v911 = vld [vmem:[%s2] sm:$0xf]
    %v912 = vld [vmem:[%s2 + $0x4] sm:$0xf]
    %v913 = vld [vmem:[%s2 + $0x8] sm:$0xf]
    %v914 = vld [vmem:[%s2 + $0xc] sm:$0xf]
    %v915 = vld [vmem:[%s2 + $0x10] sm:$0xf]
    %v916 = vld [vmem:[%s2 + $0x14] sm:$0xf]
    %v917 = vld [vmem:[%s2 + $0x18] sm:$0xf]
    %v918 = vld [vmem:[%s2 + $0x1c] sm:$0xf]
    %v919 = vld [vmem:[%s2 + $0x20] sm:$0xf]
    %v920 = vld [vmem:[%s2 + $0x24] sm:$0xf]
    %v921 = vld [vmem:[%s2 + $0x28] sm:$0xf]
    %v922 = vld [vmem:[%s2 + $0x2c] sm:$0xf]
    %v923 = vld [vmem:[%s2 + $0x30] sm:$0xf]
    %v924 = vld [vmem:[%s2 + $0x34] sm:$0xf]
    %v925 = vld [vmem:[%s2 + $0x38] sm:$0xf]
    %v926 = vld [vmem:[%s2 + $0x3c] sm:$0xf]
    %v927 = vld [vmem:[%s3 + $0x1] sm:$0x1]
    %v928 = vlaneseq
    %v929 = vshrl.u32 %v928, 7
    %v930 = vsub.s32 0, %v929
    %v931 = vrot.slane %v927, %v930
    %v948 = vunpack.c.l.b16 %v911
    %v949 = vunpack.c.l.b16 %v912
    %v950 = vunpack.c.l.b16 %v913
    %v951 = vunpack.c.l.b16 %v914
    %v952 = vunpack.c.l.b16 %v915
    %v953 = vunpack.c.l.b16 %v916
    %v954 = vunpack.c.l.b16 %v917
    %v955 = vunpack.c.l.b16 %v918
    %v956 = vunpack.c.l.b16 %v919
    %v957 = vunpack.c.l.b16 %v920
    %v958 = vunpack.c.l.b16 %v921
    %v959 = vunpack.c.l.b16 %v922
    %v960 = vunpack.c.l.b16 %v923
    %v961 = vunpack.c.l.b16 %v924
    %v962 = vunpack.c.l.b16 %v925
    %v963 = vunpack.c.l.b16 %v926
    %v964 = vpack.c.b16 %v949, %v948
    %v965 = vpack.c.b16 %v951, %v950
    %v966 = vpack.c.b16 %v953, %v952
    %v967 = vpack.c.b16 %v955, %v954
    %v968 = vpack.c.b16 %v957, %v956
    %v969 = vpack.c.b16 %v959, %v958
    %v970 = vpack.c.b16 %v961, %v960
    %v971 = vpack.c.b16 %v963, %v962
    %980 = vmatprep.subr.bf16.mxu0 0
    %981 = vmatpush1.bf16.msra.mxu0 %v971
    %982 = vmatprep.subr.bf16.mxu0 0
    %983 = vmatpush1.bf16.msra.mxu0 %v970
    %984 = vmatprep.subr.bf16.mxu0 0
    %985 = vmatpush1.bf16.msra.mxu0 %v969
    %986 = vmatprep.subr.bf16.mxu0 0
    %987 = vmatpush1.bf16.msra.mxu0 %v968
    %988 = vmatprep.subr.bf16.mxu0 0
    %989 = vmatpush1.bf16.msra.mxu0 %v967
    %990 = vmatprep.subr.bf16.mxu0 0
    %991 = vmatpush1.bf16.msra.mxu0 %v966
    %992 = vmatprep.subr.bf16.mxu0 0
    %993 = vmatpush1.bf16.msra.mxu0 %v965
    %994 = vmatprep.subr.bf16.mxu0 0
    %995 = vmatpush1.bf16.msra.mxu0 %v964
    %996 = vmatprep.subr.bf16.mxu0 0
    %997 = vmatpush2.bf16.msra.mxu0 0
    %998 = vmatprep.subr.bf16.mxu0 0
    %999 = vmatpush2.bf16.msra.mxu0 0
    %1000 = vmatprep.subr.bf16.mxu0 0
    %1001 = vmatpush2.bf16.msra.mxu0 0
    %1002 = vmatprep.subr.bf16.mxu0 0
    %1003 = vmatpush2.bf16.msra.mxu0 0
    %1004 = vmatprep.subr.bf16.mxu0 0
    %1005 = vmatpush2.bf16.msra.mxu0 0
    %1006 = vmatprep.subr.bf16.mxu0 0
    %1007 = vmatpush2.bf16.msra.mxu0 0
    %1008 = vmatprep.subr.bf16.mxu0 0
    %1009 = vmatpush2.bf16.msra.mxu0 0
    %1010 = vmatprep.subr.bf16.mxu0 0
    %1011 = vmatpush2.bf16.msra.mxu0 0
    %1012 = vmatprep.mubr.bf16.mxu0 0
    %1013 = vmatmul.mubr.bf16.gmra.mxu0 %v910
    %v1014 = vpop.f32.mrf.mxu0
    %v1015 = vadd.f32 %v931, %v1014
    %v1016 = vpop.f32.mrf.mxu0
    %v1017 = vpop.f32.mrf.mxu0
    %v1018 = vadd.f32 %v931, %v1017
    %v1019 = vpop.f32.mrf.mxu0
    %1020 = vdwg.mxu0
    %v1021 = vmax.f32 %v1015, 0.0
    %v1022 = vmax.f32 %v1018, 0.0
    %v1023 = vpack.c.bf16 %v1022, %v1021
    %s1024 = scalar_lea.vmem %s2, 64
    %v1025 = vld [vmem:[%s1024] sm:$0xf]
    %v1026 = vld [vmem:[%s1024 + $0x4] sm:$0xf]
    %v1027 = vld [vmem:[%s1024 + $0x8] sm:$0xf]
    %v1028 = vld [vmem:[%s1024 + $0xc] sm:$0xf]
    %v1029 = vld [vmem:[%s1024 + $0x10] sm:$0xf]
    %v1030 = vld [vmem:[%s1024 + $0x14] sm:$0xf]
    %v1031 = vld [vmem:[%s1024 + $0x18] sm:$0xf]
    %v1032 = vld [vmem:[%s1024 + $0x1c] sm:$0xf]
    %v1033 = vld [vmem:[%s1024 + $0x20] sm:$0xf]
    %v1034 = vld [vmem:[%s1024 + $0x24] sm:$0xf]
    %v1035 = vld [vmem:[%s1024 + $0x28] sm:$0xf]
    %v1036 = vld [vmem:[%s1024 + $0x2c] sm:$0xf]
    %v1037 = vld [vmem:[%s1024 + $0x30] sm:$0xf]
    %v1038 = vld [vmem:[%s1024 + $0x34] sm:$0xf]
    %v1039 = vld [vmem:[%s1024 + $0x38] sm:$0xf]
    %v1040 = vld [vmem:[%s1024 + $0x3c] sm:$0xf]
    %v1041 = vld [vmem:[%s3 + $0x2] sm:$0x1]
    %v1042 = vlaneseq
    %v1043 = vshrl.u32 %v1042, 7
    %v1044 = vsub.s32 0, %v1043
    %v1045 = vrot.slane %v1041, %v1044
    %v1062 = vunpack.c.l.b16 %v1025
    %v1063 = vunpack.c.l.b16 %v1026
    %v1064 = vunpack.c.l.b16 %v1027
    %v1065 = vunpack.c.l.b16 %v1028
    %v1066 = vunpack.c.l.b16 %v1029
    %v1067 = vunpack.c.l.b16 %v1030
    %v1068 = vunpack.c.l.b16 %v1031
    %v1069 = vunpack.c.l.b16 %v1032
    %v1070 = vunpack.c.l.b16 %v1033
    %v1071 = vunpack.c.l.b16 %v1034
    %v1072 = vunpack.c.l.b16 %v1035
    %v1073 = vunpack.c.l.b16 %v1036
    %v1074 = vunpack.c.l.b16 %v1037
    %v1075 = vunpack.c.l.b16 %v1038
    %v1076 = vunpack.c.l.b16 %v1039
    %v1077 = vunpack.c.l.b16 %v1040
    %v1078 = vpack.c.b16 %v1063, %v1062
    %v1079 = vpack.c.b16 %v1065, %v1064
    %v1080 = vpack.c.b16 %v1067, %v1066
    %v1081 = vpack.c.b16 %v1069, %v1068
    %v1082 = vpack.c.b16 %v1071, %v1070
    %v1083 = vpack.c.b16 %v1073, %v1072
    %v1084 = vpack.c.b16 %v1075, %v1074
    %v1085 = vpack.c.b16 %v1077, %v1076
    %1094 = vmatprep.subr.bf16.mxu0 0
    %1095 = vmatpush1.bf16.msra.mxu0 %v1085
    %1096 = vmatprep.subr.bf16.mxu0 0
    %1097 = vmatpush1.bf16.msra.mxu0 %v1084
    %1098 = vmatprep.subr.bf16.mxu0 0
    %1099 = vmatpush1.bf16.msra.mxu0 %v1083
    %1100 = vmatprep.subr.bf16.mxu0 0
    %1101 = vmatpush1.bf16.msra.mxu0 %v1082
    %1102 = vmatprep.subr.bf16.mxu0 0
    %1103 = vmatpush1.bf16.msra.mxu0 %v1081
    %1104 = vmatprep.subr.bf16.mxu0 0
    %1105 = vmatpush1.bf16.msra.mxu0 %v1080
    %1106 = vmatprep.subr.bf16.mxu0 0
    %1107 = vmatpush1.bf16.msra.mxu0 %v1079
    %1108 = vmatprep.subr.bf16.mxu0 0
    %1109 = vmatpush1.bf16.msra.mxu0 %v1078
    %1110 = vmatprep.subr.bf16.mxu0 0
    %1111 = vmatpush2.bf16.msra.mxu0 0
    %1112 = vmatprep.subr.bf16.mxu0 0
    %1113 = vmatpush2.bf16.msra.mxu0 0
    %1114 = vmatprep.subr.bf16.mxu0 0
    %1115 = vmatpush2.bf16.msra.mxu0 0
    %1116 = vmatprep.subr.bf16.mxu0 0
    %1117 = vmatpush2.bf16.msra.mxu0 0
    %1118 = vmatprep.subr.bf16.mxu0 0
    %1119 = vmatpush2.bf16.msra.mxu0 0
    %1120 = vmatprep.subr.bf16.mxu0 0
    %1121 = vmatpush2.bf16.msra.mxu0 0
    %1122 = vmatprep.subr.bf16.mxu0 0
    %1123 = vmatpush2.bf16.msra.mxu0 0
    %1124 = vmatprep.subr.bf16.mxu0 0
    %1125 = vmatpush2.bf16.msra.mxu0 0
    %1126 = vmatprep.mubr.bf16.mxu0 0
    %1127 = vmatmul.mubr.bf16.gmra.mxu0 %v1023
    %v1128 = vpop.f32.mrf.mxu0
    %v1129 = vadd.f32 %v1045, %v1128
    %v1130 = vpop.f32.mrf.mxu0
    %v1131 = vpop.f32.mrf.mxu0
    %v1132 = vadd.f32 %v1045, %v1131
    %v1133 = vpop.f32.mrf.mxu0
    %1134 = vdwg.mxu0
    %v1135 = vmax.f32 %v1129, 0.0
    %v1136 = vmax.f32 %v1132, 0.0
    %v1137 = vpack.c.bf16 %v1136, %v1135
    %s1138 = scalar_lea.vmem %s2, 128
    %v1139 = vld [vmem:[%s1138] sm:$0xf]
    %v1140 = vld [vmem:[%s1138 + $0x4] sm:$0xf]
    %v1141 = vld [vmem:[%s1138 + $0x8] sm:$0xf]
    %v1142 = vld [vmem:[%s1138 + $0xc] sm:$0xf]
    %v1143 = vld [vmem:[%s1138 + $0x10] sm:$0xf]
    %v1144 = vld [vmem:[%s1138 + $0x14] sm:$0xf]
    %v1145 = vld [vmem:[%s1138 + $0x18] sm:$0xf]
    %v1146 = vld [vmem:[%s1138 + $0x1c] sm:$0xf]
    %v1147 = vld [vmem:[%s1138 + $0x20] sm:$0xf]
    %v1148 = vld [vmem:[%s1138 + $0x24] sm:$0xf]
    %v1149 = vld [vmem:[%s1138 + $0x28] sm:$0xf]
    %v1150 = vld [vmem:[%s1138 + $0x2c] sm:$0xf]
    %v1151 = vld [vmem:[%s1138 + $0x30] sm:$0xf]
    %v1152 = vld [vmem:[%s1138 + $0x34] sm:$0xf]
    %v1153 = vld [vmem:[%s1138 + $0x38] sm:$0xf]
    %v1154 = vld [vmem:[%s1138 + $0x3c] sm:$0xf]
    %v1155 = vld [vmem:[%s3 + $0x3] sm:$0x1]
    %v1156 = vlaneseq
    %v1157 = vshrl.u32 %v1156, 7
    %v1158 = vsub.s32 0, %v1157
    %v1159 = vrot.slane %v1155, %v1158
    %v1176 = vunpack.c.l.b16 %v1139
    %v1177 = vunpack.c.l.b16 %v1140
    %v1178 = vunpack.c.l.b16 %v1141
    %v1179 = vunpack.c.l.b16 %v1142
    %v1180 = vunpack.c.l.b16 %v1143
    %v1181 = vunpack.c.l.b16 %v1144
    %v1182 = vunpack.c.l.b16 %v1145
    %v1183 = vunpack.c.l.b16 %v1146
    %v1184 = vunpack.c.l.b16 %v1147
    %v1185 = vunpack.c.l.b16 %v1148
    %v1186 = vunpack.c.l.b16 %v1149
    %v1187 = vunpack.c.l.b16 %v1150
    %v1188 = vunpack.c.l.b16 %v1151
    %v1189 = vunpack.c.l.b16 %v1152
    %v1190 = vunpack.c.l.b16 %v1153
    %v1191 = vunpack.c.l.b16 %v1154
    %v1192 = vpack.c.b16 %v1177, %v1176
    %v1193 = vpack.c.b16 %v1179, %v1178
    %v1194 = vpack.c.b16 %v1181, %v1180
    %v1195 = vpack.c.b16 %v1183, %v1182
    %v1196 = vpack.c.b16 %v1185, %v1184
    %v1197 = vpack.c.b16 %v1187, %v1186
    %v1198 = vpack.c.b16 %v1189, %v1188
    %v1199 = vpack.c.b16 %v1191, %v1190
    %1208 = vmatprep.subr.bf16.mxu0 0
    %1209 = vmatpush1.bf16.msra.mxu0 %v1199
    %1210 = vmatprep.subr.bf16.mxu0 0
    %1211 = vmatpush1.bf16.msra.mxu0 %v1198
    %1212 = vmatprep.subr.bf16.mxu0 0
    %1213 = vmatpush1.bf16.msra.mxu0 %v1197
    %1214 = vmatprep.subr.bf16.mxu0 0
    %1215 = vmatpush1.bf16.msra.mxu0 %v1196
    %1216 = vmatprep.subr.bf16.mxu0 0
    %1217 = vmatpush1.bf16.msra.mxu0 %v1195
    %1218 = vmatprep.subr.bf16.mxu0 0
    %1219 = vmatpush1.bf16.msra.mxu0 %v1194
    %1220 = vmatprep.subr.bf16.mxu0 0
    %1221 = vmatpush1.bf16.msra.mxu0 %v1193
    %1222 = vmatprep.subr.bf16.mxu0 0
    %1223 = vmatpush1.bf16.msra.mxu0 %v1192
    %1224 = vmatprep.subr.bf16.mxu0 0
    %1225 = vmatpush2.bf16.msra.mxu0 0
    %1226 = vmatprep.subr.bf16.mxu0 0
    %1227 = vmatpush2.bf16.msra.mxu0 0
    %1228 = vmatprep.subr.bf16.mxu0 0
    %1229 = vmatpush2.bf16.msra.mxu0 0
    %1230 = vmatprep.subr.bf16.mxu0 0
    %1231 = vmatpush2.bf16.msra.mxu0 0
    %1232 = vmatprep.subr.bf16.mxu0 0
    %1233 = vmatpush2.bf16.msra.mxu0 0
    %1234 = vmatprep.subr.bf16.mxu0 0
    %1235 = vmatpush2.bf16.msra.mxu0 0
    %1236 = vmatprep.subr.bf16.mxu0 0
    %1237 = vmatpush2.bf16.msra.mxu0 0
    %1238 = vmatprep.subr.bf16.mxu0 0
    %1239 = vmatpush2.bf16.msra.mxu0 0
    %1240 = vmatprep.mubr.bf16.mxu0 0
    %1241 = vmatmul.mubr.bf16.gmra.mxu0 %v1137
    %v1242 = vpop.f32.mrf.mxu0
    %v1243 = vadd.f32 %v1159, %v1242
    %v1244 = vpop.f32.mrf.mxu0
    %v1245 = vpop.f32.mrf.mxu0
    %v1246 = vadd.f32 %v1159, %v1245
    %v1247 = vpop.f32.mrf.mxu0
    %1248 = vdwg.mxu0
    %v1249 = vmax.f32 %v1243, 0.0
    %v1250 = vmax.f32 %v1246, 0.0
    %v1251 = vpack.c.bf16 %v1250, %v1249
    %s1252 = scalar_lea.vmem %s2, 192
    %v1253 = vld [vmem:[%s1252] sm:$0xf]
    %v1254 = vld [vmem:[%s1252 + $0x4] sm:$0xf]
    %v1255 = vld [vmem:[%s1252 + $0x8] sm:$0xf]
    %v1256 = vld [vmem:[%s1252 + $0xc] sm:$0xf]
    %v1257 = vld [vmem:[%s1252 + $0x10] sm:$0xf]
    %v1258 = vld [vmem:[%s1252 + $0x14] sm:$0xf]
    %v1259 = vld [vmem:[%s1252 + $0x18] sm:$0xf]
    %v1260 = vld [vmem:[%s1252 + $0x1c] sm:$0xf]
    %v1261 = vld [vmem:[%s1252 + $0x20] sm:$0xf]
    %v1262 = vld [vmem:[%s1252 + $0x24] sm:$0xf]
    %v1263 = vld [vmem:[%s1252 + $0x28] sm:$0xf]
    %v1264 = vld [vmem:[%s1252 + $0x2c] sm:$0xf]
    %v1265 = vld [vmem:[%s1252 + $0x30] sm:$0xf]
    %v1266 = vld [vmem:[%s1252 + $0x34] sm:$0xf]
    %v1267 = vld [vmem:[%s1252 + $0x38] sm:$0xf]
    %v1268 = vld [vmem:[%s1252 + $0x3c] sm:$0xf]
    %v1269 = vld [vmem:[%s3 + $0x4] sm:$0x1]
    %v1270 = vlaneseq
    %v1271 = vshrl.u32 %v1270, 7
    %v1272 = vsub.s32 0, %v1271
    %v1273 = vrot.slane %v1269, %v1272
    %v1290 = vunpack.c.l.b16 %v1253
    %v1291 = vunpack.c.l.b16 %v1254
    %v1292 = vunpack.c.l.b16 %v1255
    %v1293 = vunpack.c.l.b16 %v1256
    %v1294 = vunpack.c.l.b16 %v1257
    %v1295 = vunpack.c.l.b16 %v1258
    %v1296 = vunpack.c.l.b16 %v1259
    %v1297 = vunpack.c.l.b16 %v1260
    %v1298 = vunpack.c.l.b16 %v1261
    %v1299 = vunpack.c.l.b16 %v1262
    %v1300 = vunpack.c.l.b16 %v1263
    %v1301 = vunpack.c.l.b16 %v1264
    %v1302 = vunpack.c.l.b16 %v1265
    %v1303 = vunpack.c.l.b16 %v1266
    %v1304 = vunpack.c.l.b16 %v1267
    %v1305 = vunpack.c.l.b16 %v1268
    %v1306 = vpack.c.b16 %v1291, %v1290
    %v1307 = vpack.c.b16 %v1293, %v1292
    %v1308 = vpack.c.b16 %v1295, %v1294
    %v1309 = vpack.c.b16 %v1297, %v1296
    %v1310 = vpack.c.b16 %v1299, %v1298
    %v1311 = vpack.c.b16 %v1301, %v1300
    %v1312 = vpack.c.b16 %v1303, %v1302
    %v1313 = vpack.c.b16 %v1305, %v1304
    %1322 = vmatprep.subr.bf16.mxu0 0
    %1323 = vmatpush1.bf16.msra.mxu0 %v1313
    %1324 = vmatprep.subr.bf16.mxu0 0
    %1325 = vmatpush1.bf16.msra.mxu0 %v1312
    %1326 = vmatprep.subr.bf16.mxu0 0
    %1327 = vmatpush1.bf16.msra.mxu0 %v1311
    %1328 = vmatprep.subr.bf16.mxu0 0
    %1329 = vmatpush1.bf16.msra.mxu0 %v1310
    %1330 = vmatprep.subr.bf16.mxu0 0
    %1331 = vmatpush1.bf16.msra.mxu0 %v1309
    %1332 = vmatprep.subr.bf16.mxu0 0
    %1333 = vmatpush1.bf16.msra.mxu0 %v1308
    %1334 = vmatprep.subr.bf16.mxu0 0
    %1335 = vmatpush1.bf16.msra.mxu0 %v1307
    %1336 = vmatprep.subr.bf16.mxu0 0
    %1337 = vmatpush1.bf16.msra.mxu0 %v1306
    %1338 = vmatprep.subr.bf16.mxu0 0
    %1339 = vmatpush2.bf16.msra.mxu0 0
    %1340 = vmatprep.subr.bf16.mxu0 0
    %1341 = vmatpush2.bf16.msra.mxu0 0
    %1342 = vmatprep.subr.bf16.mxu0 0
    %1343 = vmatpush2.bf16.msra.mxu0 0
    %1344 = vmatprep.subr.bf16.mxu0 0
    %1345 = vmatpush2.bf16.msra.mxu0 0
    %1346 = vmatprep.subr.bf16.mxu0 0
    %1347 = vmatpush2.bf16.msra.mxu0 0
    %1348 = vmatprep.subr.bf16.mxu0 0
    %1349 = vmatpush2.bf16.msra.mxu0 0
    %1350 = vmatprep.subr.bf16.mxu0 0
    %1351 = vmatpush2.bf16.msra.mxu0 0
    %1352 = vmatprep.subr.bf16.mxu0 0
    %1353 = vmatpush2.bf16.msra.mxu0 0
    %1354 = vmatprep.mubr.bf16.mxu0 0
    %1355 = vmatmul.mubr.bf16.gmra.mxu0 %v1251
    %v1356 = vpop.f32.mrf.mxu0
    %v1357 = vadd.f32 %v1273, %v1356
    %v1358 = vpop.f32.mrf.mxu0
    %v1359 = vpop.f32.mrf.mxu0
    %v1360 = vadd.f32 %v1273, %v1359
    %v1361 = vpop.f32.mrf.mxu0
    %1362 = vdwg.mxu0
    %v1363 = vpack.c.bf16 %v1360, %v1357
    %v1365 = vcombine.high %v1363, %v1363
    %v1367 = vunpack.c.l.s4 1966171168
    %v1368 = vunpack.c.0.s8 %v1367
    %v1369 = vlaneseq
    %v1370 = vshrl.u32 %v1369, 7
    %v1371 = vsub.s32 %v1368, %v1370
    %v1372 = vrot.slane %v1363, %v1371
    %v1374 = vunpack.c.l.s4 1966171168
    %v1375 = vunpack.c.0.s8 %v1374
    %v1376 = vlaneseq
    %v1377 = vshrl.u32 %v1376, 7
    %v1378 = vsub.s32 %v1375, %v1377
    %v1379 = vrot.slane %v1365, %v1378
    %v1380 = vcombine.high %v1372, %v1372
    %v1381 = vcombine.high %v1379, %v1379
    %v1383 = vunpack.c.l.s4 1966171168
    %v1384 = vunpack.c.0.s8 %v1383
    %v1385 = vlaneseq
    %v1386 = vshrl.u32 %v1385, 7
    %v1387 = vsub.s32 %v1384, %v1386
    %v1388 = vrot.slane %v1372, %v1387
    %v1390 = vunpack.c.l.s4 1966171168
    %v1391 = vunpack.c.0.s8 %v1390
    %v1392 = vlaneseq
    %v1393 = vshrl.u32 %v1392, 7
    %v1394 = vsub.s32 %v1391, %v1393
    %v1395 = vrot.slane %v1379, %v1394
    %v1397 = vunpack.c.l.s4 1966171168
    %v1398 = vunpack.c.0.s8 %v1397
    %v1399 = vlaneseq
    %v1400 = vshrl.u32 %v1399, 7
    %v1401 = vsub.s32 %v1398, %v1400
    %v1402 = vrot.slane %v1380, %v1401
    %v1404 = vunpack.c.l.s4 1966171168
    %v1405 = vunpack.c.0.s8 %v1404
    %v1406 = vlaneseq
    %v1407 = vshrl.u32 %v1406, 7
    %v1408 = vsub.s32 %v1405, %v1407
    %v1409 = vrot.slane %v1381, %v1408
    %v1410 = vcombine.high %v1388, %v1388
    %v1411 = vcombine.high %v1395, %v1395
    %v1412 = vcombine.high %v1402, %v1402
    %v1413 = vcombine.high %v1409, %v1409
    %1422 = vst [vmem:[#allocation2] sm:$0x1] %v1388
    %1423 = vst [vmem:[#allocation2 + $0x1] sm:$0x1] %v1402
    %1424 = vst [vmem:[#allocation2 + $0x2] sm:$0x1] %v1410
    %1425 = vst [vmem:[#allocation2 + $0x3] sm:$0x1] %v1412
    %1426 = vst [vmem:[#allocation2 + $0x4] sm:$0x1] %v1395
    %1427 = vst [vmem:[#allocation2 + $0x5] sm:$0x1] %v1409
    %1428 = vst [vmem:[#allocation2 + $0x6] sm:$0x1] %v1411
    %1429 = vst [vmem:[#allocation2 + $0x7] sm:$0x1] %v1413
    // Predicated region
    $region18: #{sparse_layered_nn_forward.1} parent=1 // pred_check
      _
    $region19: #{sparse_layered_nn_forward.1} parent=1 // pred_check_branch
      %1431 = sbr.rel (0) target = $region21
    $region20: #{sparse_layered_nn_forward.1} parent=1 // pred_region
      // Predicated region
      $region22: #{sparse_layered_nn_forward.1} parent=20 // pred_check
        _
      $region23: #{sparse_layered_nn_forward.1} parent=20 // pred_check_branch
        %1433 = sbr.rel (0) target = $region25
      $region24: #{sparse_layered_nn_forward.1} parent=20 // pred_region
        // Predicated region
        $region26: #{sparse_layered_nn_forward.1} parent=24 // pred_check
          _
        $region27: #{sparse_layered_nn_forward.1} parent=24 // pred_check_branch
          %1435 = sbr.rel target = $region29
        $region28: #{sparse_layered_nn_forward.1} parent=24 // pred_region
          // Predicated region
          $region41: #{sparse_layered_nn_forward.1} parent=28 // pred_check
            _
          $region42: #{sparse_layered_nn_forward.1} parent=28 // pred_check_branch
            %1451 = sbr.rel (0) target = $region44
          $region43: #{sparse_layered_nn_forward.1} parent=28 // pred_region
            %s1453 = ssub.s32 2, 1
            loop: start=0, step=1, limit=1
            $region45: #{sparse_layered_nn_forward.1} parent=43 // loop_pre_header
              _
            $region46: #{sparse_layered_nn_forward.1} parent=43 // loop_header
              %s1455 = sphi 0, %s1459
              %p1456 = scmp.ge.s32.totalorder %s1455, 1
              %s1460 = sphi [#allocation2], [#allocation2]
              %s1461 = sphi %s4, %s4
            $region47: #{sparse_layered_nn_forward.1} parent=43 // loop_header_branch
              %1458 = sbr.rel (%p1456) target = $region51
            $region48: #{sparse_layered_nn_forward.1} parent=43 // loop_body
              %v1462 = vld [vmem:[%s1460] sm:%s1453]
              %1463 = vst [vmem:[%s1461] sm:%s1453] %v1462
            $region49: #{sparse_layered_nn_forward.1} parent=43 // loop_footer
              %s1459 = sadd.s32 1, %s1455
            $region50: #{sparse_layered_nn_forward.1} parent=43 // loop_footer_branch
              %1454 = sbr.rel target = $region46
            $region51: #{sparse_layered_nn_forward.1} parent=43 // loop_exit
              _
          $region44: #{sparse_layered_nn_forward.1} parent=28 // pred_fallthru
            _
        $region29: #{sparse_layered_nn_forward.1} parent=24 // pred_fallthru
          _
        // Predicated region
        $region30: #{sparse_layered_nn_forward.1} parent=24 // pred_check
          _
        $region31: #{sparse_layered_nn_forward.1} parent=24 // pred_check_branch
          %1437 = sbr.rel (0) target = $region33
        $region32: #{sparse_layered_nn_forward.1} parent=24 // pred_region
          %s1439 = ssub.s32 2, 1
          loop: start=0, step=1, limit=1
          $region34: #{sparse_layered_nn_forward.1} parent=32 // loop_pre_header
            _
          $region35: #{sparse_layered_nn_forward.1} parent=32 // loop_header
            %s1441 = sphi 0, %s1445
            %p1442 = scmp.ge.s32.totalorder %s1441, 1
            %s1446 = sphi [#allocation2], [#allocation2]
            %s1447 = sphi %s4, %s4
          $region36: #{sparse_layered_nn_forward.1} parent=32 // loop_header_branch
            %1444 = sbr.rel (%p1442) target = $region40
          $region37: #{sparse_layered_nn_forward.1} parent=32 // loop_body
            %v1448 = vld [vmem:[%s1446] sm:%s1439]
            %1449 = vst [vmem:[%s1447] sm:%s1439] %v1448
          $region38: #{sparse_layered_nn_forward.1} parent=32 // loop_footer
            %s1445 = sadd.s32 1, %s1441
          $region39: #{sparse_layered_nn_forward.1} parent=32 // loop_footer_branch
            %1440 = sbr.rel target = $region35
          $region40: #{sparse_layered_nn_forward.1} parent=32 // loop_exit
            _
        $region33: #{sparse_layered_nn_forward.1} parent=24 // pred_fallthru
          _
      $region25: #{sparse_layered_nn_forward.1} parent=20 // pred_fallthru
        _
      %1464 = vnop
    $region21: #{sparse_layered_nn_forward.1} parent=1 // pred_fallthru
      _
    // Predicated region
    $region52: #{sparse_layered_nn_forward.1} parent=1 // pred_check
      _
    $region53: #{sparse_layered_nn_forward.1} parent=1 // pred_check_branch
      %1466 = sbr.rel (0) target = $region55
    $region54: #{sparse_layered_nn_forward.1} parent=1 // pred_region
      _
    $region55: #{sparse_layered_nn_forward.1} parent=1 // pred_fallthru
      _

</llo_original>
